<compile_context>
chip_gen: v7x
topology: tpu7x:2x2x1
jax: 0.10.0
libtpu: 0.0.40
codegen_flags: <defaults>
</compile_context>

<pallas_src>
import functools

import jax
import jax.numpy as jnp
from jax.experimental import pallas as pl
from jax.experimental.pallas import tpu as pltpu


def rnn_fc_kernel(x_ref, wih0_ref, whh0_ref, wih1_ref, whh1_ref,
                  b0_ref, b1_ref, wfc_ref, bfc_ref, out_ref, *, B, T):
    """Whole forward pass in one VMEM-resident invocation.

    x_ref    : (B*T, F)  batch-major flattened input (row b*T + t)
    wih0_ref : (F, H)    layer-0 input->hidden weight, transposed (in x out)
    whh0_ref : (H, H)    layer-0 hidden->hidden weight, transposed
    wih1_ref : (H, H)    layer-1 input->hidden weight, transposed
    whh1_ref : (H, H)    layer-1 hidden->hidden weight, transposed
    b0_ref   : (1, H)    layer-0 combined bias (b_ih0 + b_hh0)
    b1_ref   : (1, H)    layer-1 combined bias (b_ih1 + b_hh1)
    wfc_ref  : (H, O)    final linear weight, transposed
    bfc_ref  : (1, O)    final linear bias
    out_ref  : (B, O)    fc(last-step hidden of layer 1)
    """
    BT, _ = x_ref.shape
    H = whh0_ref.shape[0]
    O = wfc_ref.shape[1]

    # ---- Pre-loop: layer-0 input projection, the single real-K MXU dot. ----
    # (B*T, F) @ (F, H) + (b_ih0 + b_hh0); carry-independent, off the serial chain.
    xp = jnp.dot(x_ref[...], wih0_ref[...],
                 preferred_element_type=jnp.float32) + b0_ref[...]

    # ---- Hoisted, loop-invariant broadcasts. ----
    def weight_rows(w, n_out):
        # Row k of the (in x out) weight, pre-broadcast to (B, n_out).
        return [jnp.broadcast_to(w[k:k + 1, :], (B, n_out))
                for k in range(w.shape[0])]

    whh0_rows = weight_rows(whh0_ref[...], H)
    wih1_rows = weight_rows(wih1_ref[...], H)
    whh1_rows = weight_rows(whh1_ref[...], H)
    wfc_rows = weight_rows(wfc_ref[...], O)
    b1b = jnp.broadcast_to(b1_ref[...], (B, H))
    bfcb = jnp.broadcast_to(bfc_ref[...], (B, O))

    def matvec_vpu(h, w_rows):
        # (B, Hin) @ (Hin, n_out) done as Hin broadcast-multiplies + adds on the VPU
        # (Hin == 3 here): no MXU fill/pop latency on the serial recurrence chain.
        acc = h[:, 0:1] * w_rows[0]
        for k in range(1, len(w_rows)):
            acc = acc + h[:, k:k + 1] * w_rows[k]
        return acc

    h1 = jnp.zeros((B, H), jnp.float32)
    h2 = jnp.zeros((B, H), jnp.float32)

    # Fully unrolled static time loop (T is small and static): all indices static,
    # single basic block so the scheduler can overlap the layer-1 h2 path and the
    # x_t gathers with layer-0's compute.
    for t in range(T):
        # Per-step input-projection rows (carry-independent -> hoistable by LLO).
        x_t = jnp.concatenate(
            [xp[b * T + t: b * T + t + 1, :] for b in range(B)], axis=0)  # (B, H)
        # Layer 1: h2(t-1) contribution issued first (depends only on previous h2,
        # overlaps layer-0's work).
        pre2 = matvec_vpu(h2, whh1_rows) + b1b
        # Layer 0 recurrence.
        h1 = jnp.tanh(x_t + matvec_vpu(h1, whh0_rows))
        # Layer 1 recurrence.
        h2 = jnp.tanh(pre2 + matvec_vpu(h1, wih1_rows))

    # Final linear on the last hidden state of layer 1.
    out = matvec_vpu(h2, wfc_rows) + bfcb
    out_ref[...] = out.astype(out_ref.dtype)


def task_recog_forward(x, params):
    """x: (B, T, F) batch-first (like the PyTorch module). Returns squeeze((B, O))."""
    (w_ih0, w_hh0, b_ih0, b_hh0,
     w_ih1, w_hh1, b_ih1, b_hh1,
     w_fc, b_fc) = params

    B, T, F = x.shape
    H = w_hh0.shape[0]
    O = w_fc.shape[0]

    # Free metadata reshape (row-major merge of leading dims); no HBM round trip.
    x2 = x.reshape(B * T, F).astype(jnp.float32)

    # One-time tiny parameter prep (transposes / bias folds).
    wih0_t = jnp.transpose(w_ih0)          # (F, H)
    whh0_t = jnp.transpose(w_hh0)          # (H, H)
    wih1_t = jnp.transpose(w_ih1)          # (H, H)
    whh1_t = jnp.transpose(w_hh1)          # (H, H)
    wfc_t = jnp.transpose(w_fc)            # (H, O)
    b0 = (b_ih0 + b_hh0).reshape(1, H)
    b1 = (b_ih1 + b_hh1).reshape(1, H)
    bfc = b_fc.reshape(1, O)

    vmem = pl.BlockSpec(memory_space=pltpu.MemorySpace.VMEM)
    kernel = functools.partial(rnn_fc_kernel, B=B, T=T)
    # Note: if many independent sequences are available, grow B in this single call
    # (per-step cost is ~flat in B up to ~128 rows); on v7x a leading "parallel"
    # grid axis over the batch could then shard across the 2 TensorCores.
    out = pl.pallas_call(
        kernel,
        out_shape=jax.ShapeDtypeStruct((B, O), jnp.float32),
        in_specs=[vmem] * 9,
        out_specs=vmem,
    )(x2, wih0_t, whh0_t, wih1_t, whh1_t, b0, b1, wfc_t, bfc)

    # torch .squeeze(): drop size-1 dims (no-op for B>1, O>1).
    return jnp.squeeze(out)


def reference_forward(x, params):
    """Pure-JAX reference matching torch.nn.RNN(tanh, 2 layers, batch_first) + fc."""
    (w_ih0, w_hh0, b_ih0, b_hh0,
     w_ih1, w_hh1, b_ih1, b_hh1,
     w_fc, b_fc) = params
    B, T, F = x.shape
    H = w_hh0.shape[0]

    def step(carry, x_t):
        h1, h2 = carry
        h1n = jnp.tanh(x_t @ w_ih0.T + b_ih0 + h1 @ w_hh0.T + b_hh0)
        h2n = jnp.tanh(h1n @ w_ih1.T + b_ih1 + h2 @ w_hh1.T + b_hh1)
        return (h1n, h2n), h2n

    h0 = jnp.zeros((B, H), jnp.float32)
    (_, h2_last), _ = jax.lax.scan(step, (h0, h0), jnp.transpose(x, (1, 0, 2)))
    out = h2_last @ w_fc.T + b_fc
    return jnp.squeeze(out)


def init_params(key, num_features=124, hidden_units=3, output_size=6):
    """Deterministic init mimicking PyTorch's U(-1/sqrt(H), 1/sqrt(H))."""
    H, F, O = hidden_units, num_features, output_size
    ks = jax.random.split(key, 10)
    s = 1.0 / jnp.sqrt(jnp.float32(H))
    u = lambda k, shape, sc: jax.random.uniform(k, shape, jnp.float32, -sc, sc)
    w_ih0 = u(ks[0], (H, F), s)
    w_hh0 = u(ks[1], (H, H), s)
    b_ih0 = u(ks[2], (H,), s)
    b_hh0 = u(ks[3], (H,), s)
    w_ih1 = u(ks[4], (H, H), s)
    w_hh1 = u(ks[5], (H, H), s)
    b_ih1 = u(ks[6], (H,), s)
    b_hh1 = u(ks[7], (H,), s)
    w_fc = u(ks[8], (O, H), s)
    b_fc = u(ks[9], (O,), s)
    return (w_ih0, w_hh0, b_ih0, b_hh0,
            w_ih1, w_hh1, b_ih1, b_hh1,
            w_fc, b_fc)


if __name__ == "__main__":
    key = jax.random.PRNGKey(0)
    k_x, k_p = jax.random.split(key)

    B, T, F, H, O = 2, 8, 124, 3, 6
    x = jax.random.normal(k_x, (B, T, F), jnp.float32)
    params = init_params(k_p, num_features=F, hidden_units=H, output_size=O)

    out = jax.jit(task_recog_forward)(x, params)
    out = jax.block_until_ready(out)

    ref = reference_forward(x, params)
    assert out.shape == (B, O), out.shape
    assert jnp.allclose(out, ref, atol=1e-5, rtol=1e-5), (
        f"mismatch: max err {jnp.max(jnp.abs(out - ref))}")

    print("KERNEL_OK")
</pallas_src>

<mosaic_0001>
module attributes {stable_mosaic.version = 11 : i64} {
  func.func @rnn_fc_kernel(%arg0: memref<16x124xf32, #tpu.memory_space<vmem>>, %arg1: memref<124x3xf32, #tpu.memory_space<vmem>>, %arg2: memref<3x3xf32, #tpu.memory_space<vmem>>, %arg3: memref<3x3xf32, #tpu.memory_space<vmem>>, %arg4: memref<3x3xf32, #tpu.memory_space<vmem>>, %arg5: memref<1x3xf32, #tpu.memory_space<vmem>>, %arg6: memref<1x3xf32, #tpu.memory_space<vmem>>, %arg7: memref<3x6xf32, #tpu.memory_space<vmem>>, %arg8: memref<1x6xf32, #tpu.memory_space<vmem>>, %arg9: memref<2x6xf32, #tpu.memory_space<vmem>>) attributes {dimension_semantics = [], scalar_prefetch = 0 : i64, scratch_operands = 0 : i64, tpu.core_type = #tpu.core_type<tc>} {
    %c0 = arith.constant 0 : index
    %c0_0 = arith.constant 0 : index
    %0 = vector.load %arg0[%c0, %c0_0] : memref<16x124xf32, #tpu.memory_space<vmem>>, vector<16x124xf32>
    %c0_1 = arith.constant 0 : index
    %c0_2 = arith.constant 0 : index
    %1 = vector.load %arg1[%c0_1, %c0_2] : memref<124x3xf32, #tpu.memory_space<vmem>>, vector<124x3xf32>
    %cst = arith.constant dense<0.000000e+00> : vector<16x3xf32>
    %2 = tpu.matmul %0, %1, %cst {dimension_numbers = #tpu.dot_dimension_numbers<[1], [0], [0], [1], [0, 0, 1, 1], [], []>} : vector<16x124xf32>, vector<124x3xf32>, vector<16x3xf32> -> vector<16x3xf32>
    %c0_3 = arith.constant 0 : index
    %c0_4 = arith.constant 0 : index
    %3 = vector.load %arg5[%c0_3, %c0_4] : memref<1x3xf32, #tpu.memory_space<vmem>>, vector<1x3xf32>
    %4 = vector.broadcast %3 : vector<1x3xf32> to vector<16x3xf32>
    %5 = arith.addf %2, %4 : vector<16x3xf32>
    %c0_5 = arith.constant 0 : index
    %c0_6 = arith.constant 0 : index
    %6 = vector.load %arg2[%c0_5, %c0_6] : memref<3x3xf32, #tpu.memory_space<vmem>>, vector<3x3xf32>
    %7 = vector.extract_strided_slice %6 {offsets = [0, 0], sizes = [1, 3], strides = [1, 1]} : vector<3x3xf32> to vector<1x3xf32>
    %8 = vector.shape_cast %7 : vector<1x3xf32> to vector<1x3xf32>
    %9 = vector.broadcast %8 : vector<1x3xf32> to vector<2x3xf32>
    %10 = vector.extract_strided_slice %6 {offsets = [1, 0], sizes = [1, 3], strides = [1, 1]} : vector<3x3xf32> to vector<1x3xf32>
    %11 = vector.shape_cast %10 : vector<1x3xf32> to vector<1x3xf32>
    %12 = vector.broadcast %11 : vector<1x3xf32> to vector<2x3xf32>
    %13 = vector.extract_strided_slice %6 {offsets = [2, 0], sizes = [1, 3], strides = [1, 1]} : vector<3x3xf32> to vector<1x3xf32>
    %14 = vector.shape_cast %13 : vector<1x3xf32> to vector<1x3xf32>
    %15 = vector.broadcast %14 : vector<1x3xf32> to vector<2x3xf32>
    %c0_7 = arith.constant 0 : index
    %c0_8 = arith.constant 0 : index
    %16 = vector.load %arg3[%c0_7, %c0_8] : memref<3x3xf32, #tpu.memory_space<vmem>>, vector<3x3xf32>
    %17 = vector.extract_strided_slice %16 {offsets = [0, 0], sizes = [1, 3], strides = [1, 1]} : vector<3x3xf32> to vector<1x3xf32>
    %18 = vector.shape_cast %17 : vector<1x3xf32> to vector<1x3xf32>
    %19 = vector.broadcast %18 : vector<1x3xf32> to vector<2x3xf32>
    %20 = vector.extract_strided_slice %16 {offsets = [1, 0], sizes = [1, 3], strides = [1, 1]} : vector<3x3xf32> to vector<1x3xf32>
    %21 = vector.shape_cast %20 : vector<1x3xf32> to vector<1x3xf32>
    %22 = vector.broadcast %21 : vector<1x3xf32> to vector<2x3xf32>
    %23 = vector.extract_strided_slice %16 {offsets = [2, 0], sizes = [1, 3], strides = [1, 1]} : vector<3x3xf32> to vector<1x3xf32>
    %24 = vector.shape_cast %23 : vector<1x3xf32> to vector<1x3xf32>
    %25 = vector.broadcast %24 : vector<1x3xf32> to vector<2x3xf32>
    %c0_9 = arith.constant 0 : index
    %c0_10 = arith.constant 0 : index
    %26 = vector.load %arg4[%c0_9, %c0_10] : memref<3x3xf32, #tpu.memory_space<vmem>>, vector<3x3xf32>
    %27 = vector.extract_strided_slice %26 {offsets = [0, 0], sizes = [1, 3], strides = [1, 1]} : vector<3x3xf32> to vector<1x3xf32>
    %28 = vector.shape_cast %27 : vector<1x3xf32> to vector<1x3xf32>
    %29 = vector.broadcast %28 : vector<1x3xf32> to vector<2x3xf32>
    %30 = vector.extract_strided_slice %26 {offsets = [1, 0], sizes = [1, 3], strides = [1, 1]} : vector<3x3xf32> to vector<1x3xf32>
    %31 = vector.shape_cast %30 : vector<1x3xf32> to vector<1x3xf32>
    %32 = vector.broadcast %31 : vector<1x3xf32> to vector<2x3xf32>
    %33 = vector.extract_strided_slice %26 {offsets = [2, 0], sizes = [1, 3], strides = [1, 1]} : vector<3x3xf32> to vector<1x3xf32>
    %34 = vector.shape_cast %33 : vector<1x3xf32> to vector<1x3xf32>
    %35 = vector.broadcast %34 : vector<1x3xf32> to vector<2x3xf32>
    %c0_11 = arith.constant 0 : index
    %c0_12 = arith.constant 0 : index
    %36 = vector.load %arg7[%c0_11, %c0_12] : memref<3x6xf32, #tpu.memory_space<vmem>>, vector<3x6xf32>
    %37 = vector.extract_strided_slice %36 {offsets = [0, 0], sizes = [1, 6], strides = [1, 1]} : vector<3x6xf32> to vector<1x6xf32>
    %38 = vector.shape_cast %37 : vector<1x6xf32> to vector<1x6xf32>
    %39 = vector.broadcast %38 : vector<1x6xf32> to vector<2x6xf32>
    %40 = vector.extract_strided_slice %36 {offsets = [1, 0], sizes = [1, 6], strides = [1, 1]} : vector<3x6xf32> to vector<1x6xf32>
    %41 = vector.shape_cast %40 : vector<1x6xf32> to vector<1x6xf32>
    %42 = vector.broadcast %41 : vector<1x6xf32> to vector<2x6xf32>
    %43 = vector.extract_strided_slice %36 {offsets = [2, 0], sizes = [1, 6], strides = [1, 1]} : vector<3x6xf32> to vector<1x6xf32>
    %44 = vector.shape_cast %43 : vector<1x6xf32> to vector<1x6xf32>
    %45 = vector.broadcast %44 : vector<1x6xf32> to vector<2x6xf32>
    %c0_13 = arith.constant 0 : index
    %c0_14 = arith.constant 0 : index
    %46 = vector.load %arg6[%c0_13, %c0_14] : memref<1x3xf32, #tpu.memory_space<vmem>>, vector<1x3xf32>
    %47 = vector.shape_cast %46 : vector<1x3xf32> to vector<1x3xf32>
    %48 = vector.broadcast %47 : vector<1x3xf32> to vector<2x3xf32>
    %c0_15 = arith.constant 0 : index
    %c0_16 = arith.constant 0 : index
    %49 = vector.load %arg8[%c0_15, %c0_16] : memref<1x6xf32, #tpu.memory_space<vmem>>, vector<1x6xf32>
    %50 = vector.shape_cast %49 : vector<1x6xf32> to vector<1x6xf32>
    %51 = vector.broadcast %50 : vector<1x6xf32> to vector<2x6xf32>
    %cst_17 = arith.constant 0.000000e+00 : f32
    %52 = vector.broadcast %cst_17 : f32 to vector<2x3xf32>
    %cst_18 = arith.constant 0.000000e+00 : f32
    %53 = vector.broadcast %cst_18 : f32 to vector<2x3xf32>
    %54 = vector.extract_strided_slice %5 {offsets = [0, 0], sizes = [1, 3], strides = [1, 1]} : vector<16x3xf32> to vector<1x3xf32>
    %55 = vector.extract_strided_slice %5 {offsets = [8, 0], sizes = [1, 3], strides = [1, 1]} : vector<16x3xf32> to vector<1x3xf32>
    %56 = tpu.concatenate %54, %55 in 0 : vector<1x3xf32>, vector<1x3xf32> -> vector<2x3xf32>
    %57 = vector.extract_strided_slice %53 {offsets = [0, 0], sizes = [2, 1], strides = [1, 1]} : vector<2x3xf32> to vector<2x1xf32>
    %58 = vector.broadcast %57 : vector<2x1xf32> to vector<2x3xf32>
    %59 = arith.mulf %58, %29 : vector<2x3xf32>
    %60 = vector.extract_strided_slice %53 {offsets = [0, 1], sizes = [2, 1], strides = [1, 1]} : vector<2x3xf32> to vector<2x1xf32>
    %61 = vector.broadcast %60 : vector<2x1xf32> to vector<2x3xf32>
    %62 = arith.mulf %61, %32 : vector<2x3xf32>
    %63 = arith.addf %59, %62 : vector<2x3xf32>
    %64 = vector.extract_strided_slice %53 {offsets = [0, 2], sizes = [2, 1], strides = [1, 1]} : vector<2x3xf32> to vector<2x1xf32>
    %65 = vector.broadcast %64 : vector<2x1xf32> to vector<2x3xf32>
    %66 = arith.mulf %65, %35 : vector<2x3xf32>
    %67 = arith.addf %63, %66 : vector<2x3xf32>
    %68 = arith.addf %67, %48 : vector<2x3xf32>
    %69 = vector.extract_strided_slice %52 {offsets = [0, 0], sizes = [2, 1], strides = [1, 1]} : vector<2x3xf32> to vector<2x1xf32>
    %70 = vector.broadcast %69 : vector<2x1xf32> to vector<2x3xf32>
    %71 = arith.mulf %70, %9 : vector<2x3xf32>
    %72 = vector.extract_strided_slice %52 {offsets = [0, 1], sizes = [2, 1], strides = [1, 1]} : vector<2x3xf32> to vector<2x1xf32>
    %73 = vector.broadcast %72 : vector<2x1xf32> to vector<2x3xf32>
    %74 = arith.mulf %73, %12 : vector<2x3xf32>
    %75 = arith.addf %71, %74 : vector<2x3xf32>
    %76 = vector.extract_strided_slice %52 {offsets = [0, 2], sizes = [2, 1], strides = [1, 1]} : vector<2x3xf32> to vector<2x1xf32>
    %77 = vector.broadcast %76 : vector<2x1xf32> to vector<2x3xf32>
    %78 = arith.mulf %77, %15 : vector<2x3xf32>
    %79 = arith.addf %75, %78 : vector<2x3xf32>
    %80 = arith.addf %56, %79 : vector<2x3xf32>
    %81 = math.tanh %80 : vector<2x3xf32>
    %82 = vector.extract_strided_slice %81 {offsets = [0, 0], sizes = [2, 1], strides = [1, 1]} : vector<2x3xf32> to vector<2x1xf32>
    %83 = vector.broadcast %82 : vector<2x1xf32> to vector<2x3xf32>
    %84 = arith.mulf %83, %19 : vector<2x3xf32>
    %85 = vector.extract_strided_slice %81 {offsets = [0, 1], sizes = [2, 1], strides = [1, 1]} : vector<2x3xf32> to vector<2x1xf32>
    %86 = vector.broadcast %85 : vector<2x1xf32> to vector<2x3xf32>
    %87 = arith.mulf %86, %22 : vector<2x3xf32>
    %88 = arith.addf %84, %87 : vector<2x3xf32>
    %89 = vector.extract_strided_slice %81 {offsets = [0, 2], sizes = [2, 1], strides = [1, 1]} : vector<2x3xf32> to vector<2x1xf32>
    %90 = vector.broadcast %89 : vector<2x1xf32> to vector<2x3xf32>
    %91 = arith.mulf %90, %25 : vector<2x3xf32>
    %92 = arith.addf %88, %91 : vector<2x3xf32>
    %93 = arith.addf %68, %92 : vector<2x3xf32>
    %94 = math.tanh %93 : vector<2x3xf32>
    %95 = vector.extract_strided_slice %5 {offsets = [1, 0], sizes = [1, 3], strides = [1, 1]} : vector<16x3xf32> to vector<1x3xf32>
    %96 = vector.extract_strided_slice %5 {offsets = [9, 0], sizes = [1, 3], strides = [1, 1]} : vector<16x3xf32> to vector<1x3xf32>
    %97 = tpu.concatenate %95, %96 in 0 : vector<1x3xf32>, vector<1x3xf32> -> vector<2x3xf32>
    %98 = vector.extract_strided_slice %94 {offsets = [0, 0], sizes = [2, 1], strides = [1, 1]} : vector<2x3xf32> to vector<2x1xf32>
    %99 = vector.broadcast %98 : vector<2x1xf32> to vector<2x3xf32>
    %100 = arith.mulf %99, %29 : vector<2x3xf32>
    %101 = vector.extract_strided_slice %94 {offsets = [0, 1], sizes = [2, 1], strides = [1, 1]} : vector<2x3xf32> to vector<2x1xf32>
    %102 = vector.broadcast %101 : vector<2x1xf32> to vector<2x3xf32>
    %103 = arith.mulf %102, %32 : vector<2x3xf32>
    %104 = arith.addf %100, %103 : vector<2x3xf32>
    %105 = vector.extract_strided_slice %94 {offsets = [0, 2], sizes = [2, 1], strides = [1, 1]} : vector<2x3xf32> to vector<2x1xf32>
    %106 = vector.broadcast %105 : vector<2x1xf32> to vector<2x3xf32>
    %107 = arith.mulf %106, %35 : vector<2x3xf32>
    %108 = arith.addf %104, %107 : vector<2x3xf32>
    %109 = arith.addf %108, %48 : vector<2x3xf32>
    %110 = vector.extract_strided_slice %81 {offsets = [0, 0], sizes = [2, 1], strides = [1, 1]} : vector<2x3xf32> to vector<2x1xf32>
    %111 = vector.broadcast %110 : vector<2x1xf32> to vector<2x3xf32>
    %112 = arith.mulf %111, %9 : vector<2x3xf32>
    %113 = vector.extract_strided_slice %81 {offsets = [0, 1], sizes = [2, 1], strides = [1, 1]} : vector<2x3xf32> to vector<2x1xf32>
    %114 = vector.broadcast %113 : vector<2x1xf32> to vector<2x3xf32>
    %115 = arith.mulf %114, %12 : vector<2x3xf32>
    %116 = arith.addf %112, %115 : vector<2x3xf32>
    %117 = vector.extract_strided_slice %81 {offsets = [0, 2], sizes = [2, 1], strides = [1, 1]} : vector<2x3xf32> to vector<2x1xf32>
    %118 = vector.broadcast %117 : vector<2x1xf32> to vector<2x3xf32>
    %119 = arith.mulf %118, %15 : vector<2x3xf32>
    %120 = arith.addf %116, %119 : vector<2x3xf32>
    %121 = arith.addf %97, %120 : vector<2x3xf32>
    %122 = math.tanh %121 : vector<2x3xf32>
    %123 = vector.extract_strided_slice %122 {offsets = [0, 0], sizes = [2, 1], strides = [1, 1]} : vector<2x3xf32> to vector<2x1xf32>
    %124 = vector.broadcast %123 : vector<2x1xf32> to vector<2x3xf32>
    %125 = arith.mulf %124, %19 : vector<2x3xf32>
    %126 = vector.extract_strided_slice %122 {offsets = [0, 1], sizes = [2, 1], strides = [1, 1]} : vector<2x3xf32> to vector<2x1xf32>
    %127 = vector.broadcast %126 : vector<2x1xf32> to vector<2x3xf32>
    %128 = arith.mulf %127, %22 : vector<2x3xf32>
    %129 = arith.addf %125, %128 : vector<2x3xf32>
    %130 = vector.extract_strided_slice %122 {offsets = [0, 2], sizes = [2, 1], strides = [1, 1]} : vector<2x3xf32> to vector<2x1xf32>
    %131 = vector.broadcast %130 : vector<2x1xf32> to vector<2x3xf32>
    %132 = arith.mulf %131, %25 : vector<2x3xf32>
    %133 = arith.addf %129, %132 : vector<2x3xf32>
    %134 = arith.addf %109, %133 : vector<2x3xf32>
    %135 = math.tanh %134 : vector<2x3xf32>
    %136 = vector.extract_strided_slice %5 {offsets = [2, 0], sizes = [1, 3], strides = [1, 1]} : vector<16x3xf32> to vector<1x3xf32>
    %137 = vector.extract_strided_slice %5 {offsets = [10, 0], sizes = [1, 3], strides = [1, 1]} : vector<16x3xf32> to vector<1x3xf32>
    %138 = tpu.concatenate %136, %137 in 0 : vector<1x3xf32>, vector<1x3xf32> -> vector<2x3xf32>
    %139 = vector.extract_strided_slice %135 {offsets = [0, 0], sizes = [2, 1], strides = [1, 1]} : vector<2x3xf32> to vector<2x1xf32>
    %140 = vector.broadcast %139 : vector<2x1xf32> to vector<2x3xf32>
    %141 = arith.mulf %140, %29 : vector<2x3xf32>
    %142 = vector.extract_strided_slice %135 {offsets = [0, 1], sizes = [2, 1], strides = [1, 1]} : vector<2x3xf32> to vector<2x1xf32>
    %143 = vector.broadcast %142 : vector<2x1xf32> to vector<2x3xf32>
    %144 = arith.mulf %143, %32 : vector<2x3xf32>
    %145 = arith.addf %141, %144 : vector<2x3xf32>
    %146 = vector.extract_strided_slice %135 {offsets = [0, 2], sizes = [2, 1], strides = [1, 1]} : vector<2x3xf32> to vector<2x1xf32>
    %147 = vector.broadcast %146 : vector<2x1xf32> to vector<2x3xf32>
    %148 = arith.mulf %147, %35 : vector<2x3xf32>
    %149 = arith.addf %145, %148 : vector<2x3xf32>
    %150 = arith.addf %149, %48 : vector<2x3xf32>
    %151 = vector.extract_strided_slice %122 {offsets = [0, 0], sizes = [2, 1], strides = [1, 1]} : vector<2x3xf32> to vector<2x1xf32>
    %152 = vector.broadcast %151 : vector<2x1xf32> to vector<2x3xf32>
    %153 = arith.mulf %152, %9 : vector<2x3xf32>
    %154 = vector.extract_strided_slice %122 {offsets = [0, 1], sizes = [2, 1], strides = [1, 1]} : vector<2x3xf32> to vector<2x1xf32>
    %155 = vector.broadcast %154 : vector<2x1xf32> to vector<2x3xf32>
    %156 = arith.mulf %155, %12 : vector<2x3xf32>
    %157 = arith.addf %153, %156 : vector<2x3xf32>
    %158 = vector.extract_strided_slice %122 {offsets = [0, 2], sizes = [2, 1], strides = [1, 1]} : vector<2x3xf32> to vector<2x1xf32>
    %159 = vector.broadcast %158 : vector<2x1xf32> to vector<2x3xf32>
    %160 = arith.mulf %159, %15 : vector<2x3xf32>
    %161 = arith.addf %157, %160 : vector<2x3xf32>
    %162 = arith.addf %138, %161 : vector<2x3xf32>
    %163 = math.tanh %162 : vector<2x3xf32>
    %164 = vector.extract_strided_slice %163 {offsets = [0, 0], sizes = [2, 1], strides = [1, 1]} : vector<2x3xf32> to vector<2x1xf32>
    %165 = vector.broadcast %164 : vector<2x1xf32> to vector<2x3xf32>
    %166 = arith.mulf %165, %19 : vector<2x3xf32>
    %167 = vector.extract_strided_slice %163 {offsets = [0, 1], sizes = [2, 1], strides = [1, 1]} : vector<2x3xf32> to vector<2x1xf32>
    %168 = vector.broadcast %167 : vector<2x1xf32> to vector<2x3xf32>
    %169 = arith.mulf %168, %22 : vector<2x3xf32>
    %170 = arith.addf %166, %169 : vector<2x3xf32>
    %171 = vector.extract_strided_slice %163 {offsets = [0, 2], sizes = [2, 1], strides = [1, 1]} : vector<2x3xf32> to vector<2x1xf32>
    %172 = vector.broadcast %171 : vector<2x1xf32> to vector<2x3xf32>
    %173 = arith.mulf %172, %25 : vector<2x3xf32>
    %174 = arith.addf %170, %173 : vector<2x3xf32>
    %175 = arith.addf %150, %174 : vector<2x3xf32>
    %176 = math.tanh %175 : vector<2x3xf32>
    %177 = vector.extract_strided_slice %5 {offsets = [3, 0], sizes = [1, 3], strides = [1, 1]} : vector<16x3xf32> to vector<1x3xf32>
    %178 = vector.extract_strided_slice %5 {offsets = [11, 0], sizes = [1, 3], strides = [1, 1]} : vector<16x3xf32> to vector<1x3xf32>
    %179 = tpu.concatenate %177, %178 in 0 : vector<1x3xf32>, vector<1x3xf32> -> vector<2x3xf32>
    %180 = vector.extract_strided_slice %176 {offsets = [0, 0], sizes = [2, 1], strides = [1, 1]} : vector<2x3xf32> to vector<2x1xf32>
    %181 = vector.broadcast %180 : vector<2x1xf32> to vector<2x3xf32>
    %182 = arith.mulf %181, %29 : vector<2x3xf32>
    %183 = vector.extract_strided_slice %176 {offsets = [0, 1], sizes = [2, 1], strides = [1, 1]} : vector<2x3xf32> to vector<2x1xf32>
    %184 = vector.broadcast %183 : vector<2x1xf32> to vector<2x3xf32>
    %185 = arith.mulf %184, %32 : vector<2x3xf32>
    %186 = arith.addf %182, %185 : vector<2x3xf32>
    %187 = vector.extract_strided_slice %176 {offsets = [0, 2], sizes = [2, 1], strides = [1, 1]} : vector<2x3xf32> to vector<2x1xf32>
    %188 = vector.broadcast %187 : vector<2x1xf32> to vector<2x3xf32>
    %189 = arith.mulf %188, %35 : vector<2x3xf32>
    %190 = arith.addf %186, %189 : vector<2x3xf32>
    %191 = arith.addf %190, %48 : vector<2x3xf32>
    %192 = vector.extract_strided_slice %163 {offsets = [0, 0], sizes = [2, 1], strides = [1, 1]} : vector<2x3xf32> to vector<2x1xf32>
    %193 = vector.broadcast %192 : vector<2x1xf32> to vector<2x3xf32>
    %194 = arith.mulf %193, %9 : vector<2x3xf32>
    %195 = vector.extract_strided_slice %163 {offsets = [0, 1], sizes = [2, 1], strides = [1, 1]} : vector<2x3xf32> to vector<2x1xf32>
    %196 = vector.broadcast %195 : vector<2x1xf32> to vector<2x3xf32>
    %197 = arith.mulf %196, %12 : vector<2x3xf32>
    %198 = arith.addf %194, %197 : vector<2x3xf32>
    %199 = vector.extract_strided_slice %163 {offsets = [0, 2], sizes = [2, 1], strides = [1, 1]} : vector<2x3xf32> to vector<2x1xf32>
    %200 = vector.broadcast %199 : vector<2x1xf32> to vector<2x3xf32>
    %201 = arith.mulf %200, %15 : vector<2x3xf32>
    %202 = arith.addf %198, %201 : vector<2x3xf32>
    %203 = arith.addf %179, %202 : vector<2x3xf32>
    %204 = math.tanh %203 : vector<2x3xf32>
    %205 = vector.extract_strided_slice %204 {offsets = [0, 0], sizes = [2, 1], strides = [1, 1]} : vector<2x3xf32> to vector<2x1xf32>
    %206 = vector.broadcast %205 : vector<2x1xf32> to vector<2x3xf32>
    %207 = arith.mulf %206, %19 : vector<2x3xf32>
    %208 = vector.extract_strided_slice %204 {offsets = [0, 1], sizes = [2, 1], strides = [1, 1]} : vector<2x3xf32> to vector<2x1xf32>
    %209 = vector.broadcast %208 : vector<2x1xf32> to vector<2x3xf32>
    %210 = arith.mulf %209, %22 : vector<2x3xf32>
    %211 = arith.addf %207, %210 : vector<2x3xf32>
    %212 = vector.extract_strided_slice %204 {offsets = [0, 2], sizes = [2, 1], strides = [1, 1]} : vector<2x3xf32> to vector<2x1xf32>
    %213 = vector.broadcast %212 : vector<2x1xf32> to vector<2x3xf32>
    %214 = arith.mulf %213, %25 : vector<2x3xf32>
    %215 = arith.addf %211, %214 : vector<2x3xf32>
    %216 = arith.addf %191, %215 : vector<2x3xf32>
    %217 = math.tanh %216 : vector<2x3xf32>
    %218 = vector.extract_strided_slice %5 {offsets = [4, 0], sizes = [1, 3], strides = [1, 1]} : vector<16x3xf32> to vector<1x3xf32>
    %219 = vector.extract_strided_slice %5 {offsets = [12, 0], sizes = [1, 3], strides = [1, 1]} : vector<16x3xf32> to vector<1x3xf32>
    %220 = tpu.concatenate %218, %219 in 0 : vector<1x3xf32>, vector<1x3xf32> -> vector<2x3xf32>
    %221 = vector.extract_strided_slice %217 {offsets = [0, 0], sizes = [2, 1], strides = [1, 1]} : vector<2x3xf32> to vector<2x1xf32>
    %222 = vector.broadcast %221 : vector<2x1xf32> to vector<2x3xf32>
    %223 = arith.mulf %222, %29 : vector<2x3xf32>
    %224 = vector.extract_strided_slice %217 {offsets = [0, 1], sizes = [2, 1], strides = [1, 1]} : vector<2x3xf32> to vector<2x1xf32>
    %225 = vector.broadcast %224 : vector<2x1xf32> to vector<2x3xf32>
    %226 = arith.mulf %225, %32 : vector<2x3xf32>
    %227 = arith.addf %223, %226 : vector<2x3xf32>
    %228 = vector.extract_strided_slice %217 {offsets = [0, 2], sizes = [2, 1], strides = [1, 1]} : vector<2x3xf32> to vector<2x1xf32>
    %229 = vector.broadcast %228 : vector<2x1xf32> to vector<2x3xf32>
    %230 = arith.mulf %229, %35 : vector<2x3xf32>
    %231 = arith.addf %227, %230 : vector<2x3xf32>
    %232 = arith.addf %231, %48 : vector<2x3xf32>
    %233 = vector.extract_strided_slice %204 {offsets = [0, 0], sizes = [2, 1], strides = [1, 1]} : vector<2x3xf32> to vector<2x1xf32>
    %234 = vector.broadcast %233 : vector<2x1xf32> to vector<2x3xf32>
    %235 = arith.mulf %234, %9 : vector<2x3xf32>
    %236 = vector.extract_strided_slice %204 {offsets = [0, 1], sizes = [2, 1], strides = [1, 1]} : vector<2x3xf32> to vector<2x1xf32>
    %237 = vector.broadcast %236 : vector<2x1xf32> to vector<2x3xf32>
    %238 = arith.mulf %237, %12 : vector<2x3xf32>
    %239 = arith.addf %235, %238 : vector<2x3xf32>
    %240 = vector.extract_strided_slice %204 {offsets = [0, 2], sizes = [2, 1], strides = [1, 1]} : vector<2x3xf32> to vector<2x1xf32>
    %241 = vector.broadcast %240 : vector<2x1xf32> to vector<2x3xf32>
    %242 = arith.mulf %241, %15 : vector<2x3xf32>
    %243 = arith.addf %239, %242 : vector<2x3xf32>
    %244 = arith.addf %220, %243 : vector<2x3xf32>
    %245 = math.tanh %244 : vector<2x3xf32>
    %246 = vector.extract_strided_slice %245 {offsets = [0, 0], sizes = [2, 1], strides = [1, 1]} : vector<2x3xf32> to vector<2x1xf32>
    %247 = vector.broadcast %246 : vector<2x1xf32> to vector<2x3xf32>
    %248 = arith.mulf %247, %19 : vector<2x3xf32>
    %249 = vector.extract_strided_slice %245 {offsets = [0, 1], sizes = [2, 1], strides = [1, 1]} : vector<2x3xf32> to vector<2x1xf32>
    %250 = vector.broadcast %249 : vector<2x1xf32> to vector<2x3xf32>
    %251 = arith.mulf %250, %22 : vector<2x3xf32>
    %252 = arith.addf %248, %251 : vector<2x3xf32>
    %253 = vector.extract_strided_slice %245 {offsets = [0, 2], sizes = [2, 1], strides = [1, 1]} : vector<2x3xf32> to vector<2x1xf32>
    %254 = vector.broadcast %253 : vector<2x1xf32> to vector<2x3xf32>
    %255 = arith.mulf %254, %25 : vector<2x3xf32>
    %256 = arith.addf %252, %255 : vector<2x3xf32>
    %257 = arith.addf %232, %256 : vector<2x3xf32>
    %258 = math.tanh %257 : vector<2x3xf32>
    %259 = vector.extract_strided_slice %5 {offsets = [5, 0], sizes = [1, 3], strides = [1, 1]} : vector<16x3xf32> to vector<1x3xf32>
    %260 = vector.extract_strided_slice %5 {offsets = [13, 0], sizes = [1, 3], strides = [1, 1]} : vector<16x3xf32> to vector<1x3xf32>
    %261 = tpu.concatenate %259, %260 in 0 : vector<1x3xf32>, vector<1x3xf32> -> vector<2x3xf32>
    %262 = vector.extract_strided_slice %258 {offsets = [0, 0], sizes = [2, 1], strides = [1, 1]} : vector<2x3xf32> to vector<2x1xf32>
    %263 = vector.broadcast %262 : vector<2x1xf32> to vector<2x3xf32>
    %264 = arith.mulf %263, %29 : vector<2x3xf32>
    %265 = vector.extract_strided_slice %258 {offsets = [0, 1], sizes = [2, 1], strides = [1, 1]} : vector<2x3xf32> to vector<2x1xf32>
    %266 = vector.broadcast %265 : vector<2x1xf32> to vector<2x3xf32>
    %267 = arith.mulf %266, %32 : vector<2x3xf32>
    %268 = arith.addf %264, %267 : vector<2x3xf32>
    %269 = vector.extract_strided_slice %258 {offsets = [0, 2], sizes = [2, 1], strides = [1, 1]} : vector<2x3xf32> to vector<2x1xf32>
    %270 = vector.broadcast %269 : vector<2x1xf32> to vector<2x3xf32>
    %271 = arith.mulf %270, %35 : vector<2x3xf32>
    %272 = arith.addf %268, %271 : vector<2x3xf32>
    %273 = arith.addf %272, %48 : vector<2x3xf32>
    %274 = vector.extract_strided_slice %245 {offsets = [0, 0], sizes = [2, 1], strides = [1, 1]} : vector<2x3xf32> to vector<2x1xf32>
    %275 = vector.broadcast %274 : vector<2x1xf32> to vector<2x3xf32>
    %276 = arith.mulf %275, %9 : vector<2x3xf32>
    %277 = vector.extract_strided_slice %245 {offsets = [0, 1], sizes = [2, 1], strides = [1, 1]} : vector<2x3xf32> to vector<2x1xf32>
    %278 = vector.broadcast %277 : vector<2x1xf32> to vector<2x3xf32>
    %279 = arith.mulf %278, %12 : vector<2x3xf32>
    %280 = arith.addf %276, %279 : vector<2x3xf32>
    %281 = vector.extract_strided_slice %245 {offsets = [0, 2], sizes = [2, 1], strides = [1, 1]} : vector<2x3xf32> to vector<2x1xf32>
    %282 = vector.broadcast %281 : vector<2x1xf32> to vector<2x3xf32>
    %283 = arith.mulf %282, %15 : vector<2x3xf32>
    %284 = arith.addf %280, %283 : vector<2x3xf32>
    %285 = arith.addf %261, %284 : vector<2x3xf32>
    %286 = math.tanh %285 : vector<2x3xf32>
    %287 = vector.extract_strided_slice %286 {offsets = [0, 0], sizes = [2, 1], strides = [1, 1]} : vector<2x3xf32> to vector<2x1xf32>
    %288 = vector.broadcast %287 : vector<2x1xf32> to vector<2x3xf32>
    %289 = arith.mulf %288, %19 : vector<2x3xf32>
    %290 = vector.extract_strided_slice %286 {offsets = [0, 1], sizes = [2, 1], strides = [1, 1]} : vector<2x3xf32> to vector<2x1xf32>
    %291 = vector.broadcast %290 : vector<2x1xf32> to vector<2x3xf32>
    %292 = arith.mulf %291, %22 : vector<2x3xf32>
    %293 = arith.addf %289, %292 : vector<2x3xf32>
    %294 = vector.extract_strided_slice %286 {offsets = [0, 2], sizes = [2, 1], strides = [1, 1]} : vector<2x3xf32> to vector<2x1xf32>
    %295 = vector.broadcast %294 : vector<2x1xf32> to vector<2x3xf32>
    %296 = arith.mulf %295, %25 : vector<2x3xf32>
    %297 = arith.addf %293, %296 : vector<2x3xf32>
    %298 = arith.addf %273, %297 : vector<2x3xf32>
    %299 = math.tanh %298 : vector<2x3xf32>
    %300 = vector.extract_strided_slice %5 {offsets = [6, 0], sizes = [1, 3], strides = [1, 1]} : vector<16x3xf32> to vector<1x3xf32>
    %301 = vector.extract_strided_slice %5 {offsets = [14, 0], sizes = [1, 3], strides = [1, 1]} : vector<16x3xf32> to vector<1x3xf32>
    %302 = tpu.concatenate %300, %301 in 0 : vector<1x3xf32>, vector<1x3xf32> -> vector<2x3xf32>
    %303 = vector.extract_strided_slice %299 {offsets = [0, 0], sizes = [2, 1], strides = [1, 1]} : vector<2x3xf32> to vector<2x1xf32>
    %304 = vector.broadcast %303 : vector<2x1xf32> to vector<2x3xf32>
    %305 = arith.mulf %304, %29 : vector<2x3xf32>
    %306 = vector.extract_strided_slice %299 {offsets = [0, 1], sizes = [2, 1], strides = [1, 1]} : vector<2x3xf32> to vector<2x1xf32>
    %307 = vector.broadcast %306 : vector<2x1xf32> to vector<2x3xf32>
    %308 = arith.mulf %307, %32 : vector<2x3xf32>
    %309 = arith.addf %305, %308 : vector<2x3xf32>
    %310 = vector.extract_strided_slice %299 {offsets = [0, 2], sizes = [2, 1], strides = [1, 1]} : vector<2x3xf32> to vector<2x1xf32>
    %311 = vector.broadcast %310 : vector<2x1xf32> to vector<2x3xf32>
    %312 = arith.mulf %311, %35 : vector<2x3xf32>
    %313 = arith.addf %309, %312 : vector<2x3xf32>
    %314 = arith.addf %313, %48 : vector<2x3xf32>
    %315 = vector.extract_strided_slice %286 {offsets = [0, 0], sizes = [2, 1], strides = [1, 1]} : vector<2x3xf32> to vector<2x1xf32>
    %316 = vector.broadcast %315 : vector<2x1xf32> to vector<2x3xf32>
    %317 = arith.mulf %316, %9 : vector<2x3xf32>
    %318 = vector.extract_strided_slice %286 {offsets = [0, 1], sizes = [2, 1], strides = [1, 1]} : vector<2x3xf32> to vector<2x1xf32>
    %319 = vector.broadcast %318 : vector<2x1xf32> to vector<2x3xf32>
    %320 = arith.mulf %319, %12 : vector<2x3xf32>
    %321 = arith.addf %317, %320 : vector<2x3xf32>
    %322 = vector.extract_strided_slice %286 {offsets = [0, 2], sizes = [2, 1], strides = [1, 1]} : vector<2x3xf32> to vector<2x1xf32>
    %323 = vector.broadcast %322 : vector<2x1xf32> to vector<2x3xf32>
    %324 = arith.mulf %323, %15 : vector<2x3xf32>
    %325 = arith.addf %321, %324 : vector<2x3xf32>
    %326 = arith.addf %302, %325 : vector<2x3xf32>
    %327 = math.tanh %326 : vector<2x3xf32>
    %328 = vector.extract_strided_slice %327 {offsets = [0, 0], sizes = [2, 1], strides = [1, 1]} : vector<2x3xf32> to vector<2x1xf32>
    %329 = vector.broadcast %328 : vector<2x1xf32> to vector<2x3xf32>
    %330 = arith.mulf %329, %19 : vector<2x3xf32>
    %331 = vector.extract_strided_slice %327 {offsets = [0, 1], sizes = [2, 1], strides = [1, 1]} : vector<2x3xf32> to vector<2x1xf32>
    %332 = vector.broadcast %331 : vector<2x1xf32> to vector<2x3xf32>
    %333 = arith.mulf %332, %22 : vector<2x3xf32>
    %334 = arith.addf %330, %333 : vector<2x3xf32>
    %335 = vector.extract_strided_slice %327 {offsets = [0, 2], sizes = [2, 1], strides = [1, 1]} : vector<2x3xf32> to vector<2x1xf32>
    %336 = vector.broadcast %335 : vector<2x1xf32> to vector<2x3xf32>
    %337 = arith.mulf %336, %25 : vector<2x3xf32>
    %338 = arith.addf %334, %337 : vector<2x3xf32>
    %339 = arith.addf %314, %338 : vector<2x3xf32>
    %340 = math.tanh %339 : vector<2x3xf32>
    %341 = vector.extract_strided_slice %5 {offsets = [7, 0], sizes = [1, 3], strides = [1, 1]} : vector<16x3xf32> to vector<1x3xf32>
    %342 = vector.extract_strided_slice %5 {offsets = [15, 0], sizes = [1, 3], strides = [1, 1]} : vector<16x3xf32> to vector<1x3xf32>
    %343 = tpu.concatenate %341, %342 in 0 : vector<1x3xf32>, vector<1x3xf32> -> vector<2x3xf32>
    %344 = vector.extract_strided_slice %340 {offsets = [0, 0], sizes = [2, 1], strides = [1, 1]} : vector<2x3xf32> to vector<2x1xf32>
    %345 = vector.broadcast %344 : vector<2x1xf32> to vector<2x3xf32>
    %346 = arith.mulf %345, %29 : vector<2x3xf32>
    %347 = vector.extract_strided_slice %340 {offsets = [0, 1], sizes = [2, 1], strides = [1, 1]} : vector<2x3xf32> to vector<2x1xf32>
    %348 = vector.broadcast %347 : vector<2x1xf32> to vector<2x3xf32>
    %349 = arith.mulf %348, %32 : vector<2x3xf32>
    %350 = arith.addf %346, %349 : vector<2x3xf32>
    %351 = vector.extract_strided_slice %340 {offsets = [0, 2], sizes = [2, 1], strides = [1, 1]} : vector<2x3xf32> to vector<2x1xf32>
    %352 = vector.broadcast %351 : vector<2x1xf32> to vector<2x3xf32>
    %353 = arith.mulf %352, %35 : vector<2x3xf32>
    %354 = arith.addf %350, %353 : vector<2x3xf32>
    %355 = arith.addf %354, %48 : vector<2x3xf32>
    %356 = vector.extract_strided_slice %327 {offsets = [0, 0], sizes = [2, 1], strides = [1, 1]} : vector<2x3xf32> to vector<2x1xf32>
    %357 = vector.broadcast %356 : vector<2x1xf32> to vector<2x3xf32>
    %358 = arith.mulf %357, %9 : vector<2x3xf32>
    %359 = vector.extract_strided_slice %327 {offsets = [0, 1], sizes = [2, 1], strides = [1, 1]} : vector<2x3xf32> to vector<2x1xf32>
    %360 = vector.broadcast %359 : vector<2x1xf32> to vector<2x3xf32>
    %361 = arith.mulf %360, %12 : vector<2x3xf32>
    %362 = arith.addf %358, %361 : vector<2x3xf32>
    %363 = vector.extract_strided_slice %327 {offsets = [0, 2], sizes = [2, 1], strides = [1, 1]} : vector<2x3xf32> to vector<2x1xf32>
    %364 = vector.broadcast %363 : vector<2x1xf32> to vector<2x3xf32>
    %365 = arith.mulf %364, %15 : vector<2x3xf32>
    %366 = arith.addf %362, %365 : vector<2x3xf32>
    %367 = arith.addf %343, %366 : vector<2x3xf32>
    %368 = math.tanh %367 : vector<2x3xf32>
    %369 = vector.extract_strided_slice %368 {offsets = [0, 0], sizes = [2, 1], strides = [1, 1]} : vector<2x3xf32> to vector<2x1xf32>
    %370 = vector.broadcast %369 : vector<2x1xf32> to vector<2x3xf32>
    %371 = arith.mulf %370, %19 : vector<2x3xf32>
    %372 = vector.extract_strided_slice %368 {offsets = [0, 1], sizes = [2, 1], strides = [1, 1]} : vector<2x3xf32> to vector<2x1xf32>
    %373 = vector.broadcast %372 : vector<2x1xf32> to vector<2x3xf32>
    %374 = arith.mulf %373, %22 : vector<2x3xf32>
    %375 = arith.addf %371, %374 : vector<2x3xf32>
    %376 = vector.extract_strided_slice %368 {offsets = [0, 2], sizes = [2, 1], strides = [1, 1]} : vector<2x3xf32> to vector<2x1xf32>
    %377 = vector.broadcast %376 : vector<2x1xf32> to vector<2x3xf32>
    %378 = arith.mulf %377, %25 : vector<2x3xf32>
    %379 = arith.addf %375, %378 : vector<2x3xf32>
    %380 = arith.addf %355, %379 : vector<2x3xf32>
    %381 = math.tanh %380 : vector<2x3xf32>
    %382 = vector.extract_strided_slice %381 {offsets = [0, 0], sizes = [2, 1], strides = [1, 1]} : vector<2x3xf32> to vector<2x1xf32>
    %383 = vector.broadcast %382 : vector<2x1xf32> to vector<2x6xf32>
    %384 = arith.mulf %383, %39 : vector<2x6xf32>
    %385 = vector.extract_strided_slice %381 {offsets = [0, 1], sizes = [2, 1], strides = [1, 1]} : vector<2x3xf32> to vector<2x1xf32>
    %386 = vector.broadcast %385 : vector<2x1xf32> to vector<2x6xf32>
    %387 = arith.mulf %386, %42 : vector<2x6xf32>
    %388 = arith.addf %384, %387 : vector<2x6xf32>
    %389 = vector.extract_strided_slice %381 {offsets = [0, 2], sizes = [2, 1], strides = [1, 1]} : vector<2x3xf32> to vector<2x1xf32>
    %390 = vector.broadcast %389 : vector<2x1xf32> to vector<2x6xf32>
    %391 = arith.mulf %390, %45 : vector<2x6xf32>
    %392 = arith.addf %388, %391 : vector<2x6xf32>
    %393 = arith.addf %392, %51 : vector<2x6xf32>
    %c0_19 = arith.constant 0 : index
    %c0_20 = arith.constant 0 : index
    %394 = vector.load %arg9[%c0_19, %c0_20] : memref<2x6xf32, #tpu.memory_space<vmem>>, vector<2x6xf32>
    tpu.vector_store %arg9[%c0_19, %c0_20], %393 {strides = array<i32>} : memref<2x6xf32, #tpu.memory_space<vmem>>, vector<2x6xf32>,
    return
  }
}

</mosaic_0001>

<llo_original>
// kernel: task_recog_forward.1
$region0: #{task_recog_forward.1}
  #allocation0 [shape = 'u32[]', space=smem, size = 0x4, offset = 0x4, fixed_abs, tag = 'smem constant byte address 0x4 - core index']
  #allocation1 [shape = 'u32[144,128]{1,0:T(1,128)}', space=vmem, size = 0x12000, scoped, tag = 'internal scratch']
  %s0 = inlined_call_operand.vmem [shape: f32[16,124], index: 0, kind: input, shape index: {}]
  %s1 = inlined_call_operand.vmem [shape: f32[124,3], index: 1, kind: input, shape index: {}]
  %s2 = inlined_call_operand.vmem [shape: f32[3,3], index: 2, kind: input, shape index: {}]
  %s3 = inlined_call_operand.vmem [shape: f32[3,3], index: 3, kind: input, shape index: {}]
  %s4 = inlined_call_operand.vmem [shape: f32[3,3], index: 4, kind: input, shape index: {}]
  %s5 = inlined_call_operand.vmem [shape: f32[1,3], index: 5, kind: input, shape index: {}]
  %s6 = inlined_call_operand.vmem [shape: f32[1,3], index: 6, kind: input, shape index: {}]
  %s7 = inlined_call_operand.vmem [shape: f32[3,6], index: 7, kind: input, shape index: {}]
  %s8 = inlined_call_operand.vmem [shape: f32[1,6], index: 8, kind: input, shape index: {}]
  %s9 = inlined_call_operand.hbm [shape: f32[2,6], index: 9, kind: output, shape index: {}]
  %s10 = sld [smem:[#allocation0]]
  $region46: #{task_recog_forward.1} parent=0
    _
  %s12 = ssub.s32 1, %s10
  %s13 = scalar_select 0, %s12, %s10
  $region1: #{task_recog_forward.1} parent=0
    #allocation2 [shape = 'u8[1024]{0}', space=vmem, size = 0x400, scoped, tag = 'output window, operand 0, single buffered']
    #allocation3 [shape = 's32[1]{0}', space=sflag, size = 0x4, scoped, tag = 'scoped memory for task_recog_forward.1']
    %14 = vsyncpa [#allocation3], 0
    // Predicated region
    $region2: #{task_recog_forward.1} parent=1 // pred_check
      _
    $region3: #{task_recog_forward.1} parent=1 // pred_check_branch
      %16 = sbr.rel (0) target = $region5
    $region4: #{task_recog_forward.1} parent=1 // pred_region
      _
    $region5: #{task_recog_forward.1} parent=1 // pred_fallthru
      _
    // Predicated region
    $region6: #{task_recog_forward.1} parent=1 // pred_check
      _
    $region7: #{task_recog_forward.1} parent=1 // pred_check_branch
      %18 = sbr.rel (0) target = $region9
    $region8: #{task_recog_forward.1} parent=1 // pred_region
      _
    $region9: #{task_recog_forward.1} parent=1 // pred_fallthru
      _
    // Predicated region
    $region10: #{task_recog_forward.1} parent=1 // pred_check
      _
    $region11: #{task_recog_forward.1} parent=1 // pred_check_branch
      %20 = sbr.rel (0) target = $region13
    $region12: #{task_recog_forward.1} parent=1 // pred_region
      _
    $region13: #{task_recog_forward.1} parent=1 // pred_fallthru
      _
    // Predicated region
    $region14: #{task_recog_forward.1} parent=1 // pred_check
      _
    $region15: #{task_recog_forward.1} parent=1 // pred_check_branch
      %22 = sbr.rel (0) target = $region17
    $region16: #{task_recog_forward.1} parent=1 // pred_region
      _
    $region17: #{task_recog_forward.1} parent=1 // pred_fallthru
      _
    // Predicated region
    $region18: #{task_recog_forward.1} parent=1 // pred_check
      _
    $region19: #{task_recog_forward.1} parent=1 // pred_check_branch
      %24 = sbr.rel (0) target = $region21
    $region20: #{task_recog_forward.1} parent=1 // pred_region
      _
    $region21: #{task_recog_forward.1} parent=1 // pred_fallthru
      _
    // Predicated region
    $region22: #{task_recog_forward.1} parent=1 // pred_check
      _
    $region23: #{task_recog_forward.1} parent=1 // pred_check_branch
      %26 = sbr.rel (0) target = $region25
    $region24: #{task_recog_forward.1} parent=1 // pred_region
      _
    $region25: #{task_recog_forward.1} parent=1 // pred_fallthru
      _
    // Predicated region
    $region26: #{task_recog_forward.1} parent=1 // pred_check
      _
    $region27: #{task_recog_forward.1} parent=1 // pred_check_branch
      %28 = sbr.rel (0) target = $region29
    $region28: #{task_recog_forward.1} parent=1 // pred_region
      _
    $region29: #{task_recog_forward.1} parent=1 // pred_fallthru
      _
    // Predicated region
    $region30: #{task_recog_forward.1} parent=1 // pred_check
      _
    $region31: #{task_recog_forward.1} parent=1 // pred_check_branch
      %30 = sbr.rel (0) target = $region33
    $region32: #{task_recog_forward.1} parent=1 // pred_region
      _
    $region33: #{task_recog_forward.1} parent=1 // pred_fallthru
      _
    // Predicated region
    $region34: #{task_recog_forward.1} parent=1 // pred_check
      _
    $region35: #{task_recog_forward.1} parent=1 // pred_check_branch
      %32 = sbr.rel (0) target = $region37
    $region36: #{task_recog_forward.1} parent=1 // pred_region
      _
    $region37: #{task_recog_forward.1} parent=1 // pred_fallthru
      _
    %v33 = vld [vmem:[%s0] sm:$0xff]
    %v34 = vld [vmem:[%s0 + $0x8] sm:$0xff]
    %v35 = vld [vmem:[%s1] sm:$0xff]
    %v36 = vld [vmem:[%s1 + $0x8] sm:$0xff]
    %v37 = vld [vmem:[%s1 + $0x10] sm:$0xff]
    %v38 = vld [vmem:[%s1 + $0x18] sm:$0xff]
    %v39 = vld [vmem:[%s1 + $0x20] sm:$0xff]
    %v40 = vld [vmem:[%s1 + $0x28] sm:$0xff]
    %v41 = vld [vmem:[%s1 + $0x30] sm:$0xff]
    %v42 = vld [vmem:[%s1 + $0x38] sm:$0xff]
    %v43 = vld [vmem:[%s1 + $0x40] sm:$0xff]
    %v44 = vld [vmem:[%s1 + $0x48] sm:$0xff]
    %v45 = vld [vmem:[%s1 + $0x50] sm:$0xff]
    %v46 = vld [vmem:[%s1 + $0x58] sm:$0xff]
    %v47 = vld [vmem:[%s1 + $0x60] sm:$0xff]
    %v48 = vld [vmem:[%s1 + $0x68] sm:$0xff]
    %v49 = vld [vmem:[%s1 + $0x70] sm:$0xff]
    %v50 = vld [vmem:[%s1 + $0x78] sm:$0xf]
    %v51 = vld [vmem:[%s5] sm:$0x1]
    %v53 = vlaneseq
    %v54 = vshrl.u32 %v53, 7
    %v55 = vsub.s32 0, %v54
    %v56 = vrot.slane %v51, %v55
    %vm58 = vcmask 1014784
    %v60 = vsel %vm58, %v33, 0
    %v63 = vsel %vm58, %v34, 0
    %vm65 = vcmask 1043456
    %v67 = vsel %vm65, %v50, 0
    %69 = vmatprep.subr.mxu0 0.0
    %70 = vmatpush1.msra.mxu0 %v35
    %71 = vmatprep.subr.mxu0 0.0
    %72 = vmatpush1.msra.mxu0 %v36
    %73 = vmatprep.subr.mxu0 0.0
    %74 = vmatpush1.msra.mxu0 %v37
    %75 = vmatprep.subr.mxu0 0.0
    %76 = vmatpush1.msra.mxu0 %v38
    %77 = vmatprep.subr.mxu0 0.0
    %78 = vmatpush1.msra.mxu0 %v39
    %79 = vmatprep.subr.mxu0 0.0
    %80 = vmatpush1.msra.mxu0 %v40
    %81 = vmatprep.subr.mxu0 0.0
    %82 = vmatpush1.msra.mxu0 %v41
    %83 = vmatprep.subr.mxu0 0.0
    %84 = vmatpush1.msra.mxu0 %v42
    %85 = vmatprep.subr.mxu0 0.0
    %86 = vmatpush1.msra.mxu0 %v43
    %87 = vmatprep.subr.mxu0 0.0
    %88 = vmatpush1.msra.mxu0 %v44
    %89 = vmatprep.subr.mxu0 0.0
    %90 = vmatpush1.msra.mxu0 %v45
    %91 = vmatprep.subr.mxu0 0.0
    %92 = vmatpush1.msra.mxu0 %v46
    %93 = vmatprep.subr.mxu0 0.0
    %94 = vmatpush1.msra.mxu0 %v47
    %95 = vmatprep.subr.mxu0 0.0
    %96 = vmatpush1.msra.mxu0 %v48
    %97 = vmatprep.subr.mxu0 0.0
    %98 = vmatpush1.msra.mxu0 %v49
    %99 = vmatprep.subr.mxu0 0.0
    %100 = vmatpush1.msra.mxu0 %v67
    %101 = vmatprep.subr.mxu0 0.0
    %102 = vmatpush1.msra.mxu0 0.0
    %103 = vmatprep.subr.mxu0 0.0
    %104 = vmatpush1.msra.mxu0 0.0
    %105 = vmatprep.subr.mxu0 0.0
    %106 = vmatpush1.msra.mxu0 0.0
    %107 = vmatprep.subr.mxu0 0.0
    %108 = vmatpush1.msra.mxu0 0.0
    %109 = vmatprep.subr.mxu0 0.0
    %110 = vmatpush1.msra.mxu0 0.0
    %111 = vmatprep.subr.mxu0 0.0
    %112 = vmatpush1.msra.mxu0 0.0
    %113 = vmatprep.subr.mxu0 0.0
    %114 = vmatpush1.msra.mxu0 0.0
    %115 = vmatprep.subr.mxu0 0.0
    %116 = vmatpush1.msra.mxu0 0.0
    %117 = vmatprep.subr.mxu0 0.0
    %118 = vmatpush1.msra.mxu0 0.0
    %119 = vmatprep.subr.mxu0 0.0
    %120 = vmatpush1.msra.mxu0 0.0
    %121 = vmatprep.subr.mxu0 0.0
    %122 = vmatpush1.msra.mxu0 0.0
    %123 = vmatprep.subr.mxu0 0.0
    %124 = vmatpush1.msra.mxu0 0.0
    %125 = vmatprep.subr.mxu0 0.0
    %126 = vmatpush1.msra.mxu0 0.0
    %127 = vmatprep.subr.mxu0 0.0
    %128 = vmatpush1.msra.mxu0 0.0
    %129 = vmatprep.subr.mxu0 0.0
    %130 = vmatpush1.msra.mxu0 0.0
    %131 = vmatprep.subr.mxu0 0.0
    %132 = vmatpush1.msra.mxu0 0.0
    %133 = vmatprep.mubr.f32.mxu0 0.0
    %134 = vmatmul.mubr.f32.gmra.mrb[0].mxu0 %v60
    %v135 = vpop.f32.mrb[0].mxu0
    %v136 = vadd.f32 %v56, %v135
    %v137 = vpop.f32.mrb[0].mxu0
    %138 = vmatprep.mubr.f32.mxu0 0.0
    %139 = vmatmul.mubr.f32.gmra.mrb[0].mxu0 %v63
    %v140 = vpop.f32.mrb[0].mxu0
    %v141 = vadd.f32 %v56, %v140
    %v142 = vpop.f32.mrb[0].mxu0
    %143 = vdwg.mxu0
    %v144 = vld [vmem:[%s2] sm:$0x7]
    %v145 = vlaneseq
    %v146 = vshrl.u32 %v145, 7
    %v147 = vsub.s32 0, %v146
    %v148 = vrot.slane %v144, %v147
    %v149 = vlaneseq
    %v150 = vshrl.u32 %v149, 7
    %v151 = vsub.s32 1, %v150
    %v152 = vrot.slane %v144, %v151
    %v153 = vlaneseq
    %v154 = vshrl.u32 %v153, 7
    %v155 = vsub.s32 2, %v154
    %v156 = vrot.slane %v144, %v155
    %v157 = vld [vmem:[%s3] sm:$0x7]
    %v158 = vlaneseq
    %v159 = vshrl.u32 %v158, 7
    %v160 = vsub.s32 0, %v159
    %v161 = vrot.slane %v157, %v160
    %v162 = vlaneseq
    %v163 = vshrl.u32 %v162, 7
    %v164 = vsub.s32 1, %v163
    %v165 = vrot.slane %v157, %v164
    %v166 = vlaneseq
    %v167 = vshrl.u32 %v166, 7
    %v168 = vsub.s32 2, %v167
    %v169 = vrot.slane %v157, %v168
    %v170 = vld [vmem:[%s4] sm:$0x7]
    %v171 = vlaneseq
    %v172 = vshrl.u32 %v171, 7
    %v173 = vsub.s32 0, %v172
    %v174 = vrot.slane %v170, %v173
    %v175 = vlaneseq
    %v176 = vshrl.u32 %v175, 7
    %v177 = vsub.s32 1, %v176
    %v178 = vrot.slane %v170, %v177
    %v179 = vlaneseq
    %v180 = vshrl.u32 %v179, 7
    %v181 = vsub.s32 2, %v180
    %v182 = vrot.slane %v170, %v181
    %v183 = vld [vmem:[%s7] sm:$0x7]
    %v184 = vlaneseq
    %v185 = vshrl.u32 %v184, 7
    %v186 = vsub.s32 0, %v185
    %v187 = vrot.slane %v183, %v186
    %v188 = vlaneseq
    %v189 = vshrl.u32 %v188, 7
    %v190 = vsub.s32 1, %v189
    %v191 = vrot.slane %v183, %v190
    %v192 = vlaneseq
    %v193 = vshrl.u32 %v192, 7
    %v194 = vsub.s32 2, %v193
    %v195 = vrot.slane %v183, %v194
    %v196 = vld [vmem:[%s6] sm:$0x1]
    %v198 = vlaneseq
    %v199 = vshrl.u32 %v198, 7
    %v200 = vsub.s32 0, %v199
    %v201 = vrot.slane %v196, %v200
    %v203 = vld [vmem:[%s8] sm:$0x1]
    %v205 = vlaneseq
    %v206 = vshrl.u32 %v205, 7
    %v207 = vsub.s32 0, %v206
    %v208 = vrot.slane %v203, %v207
    %v211 = vrot.slane %v141, 7
    %vm213 = vcmask 1040384
    %v214 = vsel %vm213, %v136, %v211
    %v215 = vmul.f32 %v174, 0.0
    %v216 = vmul.f32 %v178, 0.0
    %v217 = vadd.f32 %v215, %v216
    %v218 = vmul.f32 %v182, 0.0
    %v219 = vadd.f32 %v217, %v218
    %v220 = vadd.f32 %v219, %v201
    %v221 = vmul.f32 %v148, 0.0
    %v222 = vmul.f32 %v152, 0.0
    %v223 = vadd.f32 %v221, %v222
    %v224 = vmul.f32 %v156, 0.0
    %v225 = vadd.f32 %v223, %v224
    %v226 = vadd.f32 %v214, %v225
    %v227 = vtanh.pop %v226
    %229 = vset.pattern.permute.xlu0 0
    %230 = vperm.xlu0 %229, %v227
    %v231 = vpop.permute.xlu0 %230
    %v233 = vmul.f32 %v231, %v161
    %234 = vset.pattern.permute.xlu0 1
    %235 = vperm.xlu0 %234, %v227
    %v236 = vpop.permute.xlu0 %235
    %v238 = vmul.f32 %v236, %v165
    %v239 = vadd.f32 %v233, %v238
    %240 = vset.pattern.permute.xlu0 2
    %241 = vperm.xlu0 %240, %v227
    %v242 = vpop.permute.xlu0 %241
    %v244 = vmul.f32 %v242, %v169
    %v245 = vadd.f32 %v239, %v244
    %v246 = vadd.f32 %v220, %v245
    %v247 = vtanh.pop %v246
    %v249 = vrot.slane %v136, 1
    %v251 = vsel %vm213, %v249, %v141
    %253 = vset.pattern.permute.xlu0 0
    %254 = vperm.xlu0 %253, %v247
    %v255 = vpop.permute.xlu0 %254
    %v257 = vmul.f32 %v255, %v174
    %258 = vset.pattern.permute.xlu0 1
    %259 = vperm.xlu0 %258, %v247
    %v260 = vpop.permute.xlu0 %259
    %v262 = vmul.f32 %v260, %v178
    %v263 = vadd.f32 %v257, %v262
    %264 = vset.pattern.permute.xlu0 2
    %265 = vperm.xlu0 %264, %v247
    %v266 = vpop.permute.xlu0 %265
    %v268 = vmul.f32 %v266, %v182
    %v269 = vadd.f32 %v263, %v268
    %v270 = vadd.f32 %v269, %v201
    %v271 = vmul.f32 %v231, %v148
    %v272 = vmul.f32 %v236, %v152
    %v273 = vadd.f32 %v271, %v272
    %v274 = vmul.f32 %v242, %v156
    %v275 = vadd.f32 %v273, %v274
    %v276 = vadd.f32 %v251, %v275
    %v277 = vtanh.pop %v276
    %279 = vset.pattern.permute.xlu0 0
    %280 = vperm.xlu0 %279, %v277
    %v281 = vpop.permute.xlu0 %280
    %v283 = vmul.f32 %v281, %v161
    %284 = vset.pattern.permute.xlu0 1
    %285 = vperm.xlu0 %284, %v277
    %v286 = vpop.permute.xlu0 %285
    %v288 = vmul.f32 %v286, %v165
    %v289 = vadd.f32 %v283, %v288
    %290 = vset.pattern.permute.xlu0 2
    %291 = vperm.xlu0 %290, %v277
    %v292 = vpop.permute.xlu0 %291
    %v294 = vmul.f32 %v292, %v169
    %v295 = vadd.f32 %v289, %v294
    %v296 = vadd.f32 %v270, %v295
    %v297 = vtanh.pop %v296
    %v298 = vrot.slane %v136, 2
    %v300 = vrot.slane %v141, 1
    %v302 = vsel %vm213, %v298, %v300
    %304 = vset.pattern.permute.xlu0 0
    %305 = vperm.xlu0 %304, %v297
    %v306 = vpop.permute.xlu0 %305
    %v308 = vmul.f32 %v306, %v174
    %309 = vset.pattern.permute.xlu0 1
    %310 = vperm.xlu0 %309, %v297
    %v311 = vpop.permute.xlu0 %310
    %v313 = vmul.f32 %v311, %v178
    %v314 = vadd.f32 %v308, %v313
    %315 = vset.pattern.permute.xlu0 2
    %316 = vperm.xlu0 %315, %v297
    %v317 = vpop.permute.xlu0 %316
    %v319 = vmul.f32 %v317, %v182
    %v320 = vadd.f32 %v314, %v319
    %v321 = vadd.f32 %v320, %v201
    %v322 = vmul.f32 %v281, %v148
    %v323 = vmul.f32 %v286, %v152
    %v324 = vadd.f32 %v322, %v323
    %v325 = vmul.f32 %v292, %v156
    %v326 = vadd.f32 %v324, %v325
    %v327 = vadd.f32 %v302, %v326
    %v328 = vtanh.pop %v327
    %330 = vset.pattern.permute.xlu0 0
    %331 = vperm.xlu0 %330, %v328
    %v332 = vpop.permute.xlu0 %331
    %v334 = vmul.f32 %v332, %v161
    %335 = vset.pattern.permute.xlu0 1
    %336 = vperm.xlu0 %335, %v328
    %v337 = vpop.permute.xlu0 %336
    %v339 = vmul.f32 %v337, %v165
    %v340 = vadd.f32 %v334, %v339
    %341 = vset.pattern.permute.xlu0 2
    %342 = vperm.xlu0 %341, %v328
    %v343 = vpop.permute.xlu0 %342
    %v345 = vmul.f32 %v343, %v169
    %v346 = vadd.f32 %v340, %v345
    %v347 = vadd.f32 %v321, %v346
    %v348 = vtanh.pop %v347
    %v349 = vrot.slane %v136, 3
    %v351 = vrot.slane %v141, 2
    %v353 = vsel %vm213, %v349, %v351
    %355 = vset.pattern.permute.xlu0 0
    %356 = vperm.xlu0 %355, %v348
    %v357 = vpop.permute.xlu0 %356
    %v359 = vmul.f32 %v357, %v174
    %360 = vset.pattern.permute.xlu0 1
    %361 = vperm.xlu0 %360, %v348
    %v362 = vpop.permute.xlu0 %361
    %v364 = vmul.f32 %v362, %v178
    %v365 = vadd.f32 %v359, %v364
    %366 = vset.pattern.permute.xlu0 2
    %367 = vperm.xlu0 %366, %v348
    %v368 = vpop.permute.xlu0 %367
    %v370 = vmul.f32 %v368, %v182
    %v371 = vadd.f32 %v365, %v370
    %v372 = vadd.f32 %v371, %v201
    %v373 = vmul.f32 %v332, %v148
    %v374 = vmul.f32 %v337, %v152
    %v375 = vadd.f32 %v373, %v374
    %v376 = vmul.f32 %v343, %v156
    %v377 = vadd.f32 %v375, %v376
    %v378 = vadd.f32 %v353, %v377
    %v379 = vtanh.pop %v378
    %381 = vset.pattern.permute.xlu0 0
    %382 = vperm.xlu0 %381, %v379
    %v383 = vpop.permute.xlu0 %382
    %v385 = vmul.f32 %v383, %v161
    %386 = vset.pattern.permute.xlu0 1
    %387 = vperm.xlu0 %386, %v379
    %v388 = vpop.permute.xlu0 %387
    %v390 = vmul.f32 %v388, %v165
    %v391 = vadd.f32 %v385, %v390
    %392 = vset.pattern.permute.xlu0 2
    %393 = vperm.xlu0 %392, %v379
    %v394 = vpop.permute.xlu0 %393
    %v396 = vmul.f32 %v394, %v169
    %v397 = vadd.f32 %v391, %v396
    %v398 = vadd.f32 %v372, %v397
    %v399 = vtanh.pop %v398
    %v400 = vrot.slane %v136, 4
    %v402 = vrot.slane %v141, 3
    %v404 = vsel %vm213, %v400, %v402
    %406 = vset.pattern.permute.xlu0 0
    %407 = vperm.xlu0 %406, %v399
    %v408 = vpop.permute.xlu0 %407
    %v410 = vmul.f32 %v408, %v174
    %411 = vset.pattern.permute.xlu0 1
    %412 = vperm.xlu0 %411, %v399
    %v413 = vpop.permute.xlu0 %412
    %v415 = vmul.f32 %v413, %v178
    %v416 = vadd.f32 %v410, %v415
    %417 = vset.pattern.permute.xlu0 2
    %418 = vperm.xlu0 %417, %v399
    %v419 = vpop.permute.xlu0 %418
    %v421 = vmul.f32 %v419, %v182
    %v422 = vadd.f32 %v416, %v421
    %v423 = vadd.f32 %v422, %v201
    %v424 = vmul.f32 %v383, %v148
    %v425 = vmul.f32 %v388, %v152
    %v426 = vadd.f32 %v424, %v425
    %v427 = vmul.f32 %v394, %v156
    %v428 = vadd.f32 %v426, %v427
    %v429 = vadd.f32 %v404, %v428
    %v430 = vtanh.pop %v429
    %432 = vset.pattern.permute.xlu0 0
    %433 = vperm.xlu0 %432, %v430
    %v434 = vpop.permute.xlu0 %433
    %v436 = vmul.f32 %v434, %v161
    %437 = vset.pattern.permute.xlu0 1
    %438 = vperm.xlu0 %437, %v430
    %v439 = vpop.permute.xlu0 %438
    %v441 = vmul.f32 %v439, %v165
    %v442 = vadd.f32 %v436, %v441
    %443 = vset.pattern.permute.xlu0 2
    %444 = vperm.xlu0 %443, %v430
    %v445 = vpop.permute.xlu0 %444
    %v447 = vmul.f32 %v445, %v169
    %v448 = vadd.f32 %v442, %v447
    %v449 = vadd.f32 %v423, %v448
    %v450 = vtanh.pop %v449
    %v451 = vrot.slane %v136, 5
    %v453 = vrot.slane %v141, 4
    %v455 = vsel %vm213, %v451, %v453
    %457 = vset.pattern.permute.xlu0 0
    %458 = vperm.xlu0 %457, %v450
    %v459 = vpop.permute.xlu0 %458
    %v461 = vmul.f32 %v459, %v174
    %462 = vset.pattern.permute.xlu0 1
    %463 = vperm.xlu0 %462, %v450
    %v464 = vpop.permute.xlu0 %463
    %v466 = vmul.f32 %v464, %v178
    %v467 = vadd.f32 %v461, %v466
    %468 = vset.pattern.permute.xlu0 2
    %469 = vperm.xlu0 %468, %v450
    %v470 = vpop.permute.xlu0 %469
    %v472 = vmul.f32 %v470, %v182
    %v473 = vadd.f32 %v467, %v472
    %v474 = vadd.f32 %v473, %v201
    %v475 = vmul.f32 %v434, %v148
    %v476 = vmul.f32 %v439, %v152
    %v477 = vadd.f32 %v475, %v476
    %v478 = vmul.f32 %v445, %v156
    %v479 = vadd.f32 %v477, %v478
    %v480 = vadd.f32 %v455, %v479
    %v481 = vtanh.pop %v480
    %483 = vset.pattern.permute.xlu0 0
    %484 = vperm.xlu0 %483, %v481
    %v485 = vpop.permute.xlu0 %484
    %v487 = vmul.f32 %v485, %v161
    %488 = vset.pattern.permute.xlu0 1
    %489 = vperm.xlu0 %488, %v481
    %v490 = vpop.permute.xlu0 %489
    %v492 = vmul.f32 %v490, %v165
    %v493 = vadd.f32 %v487, %v492
    %494 = vset.pattern.permute.xlu0 2
    %495 = vperm.xlu0 %494, %v481
    %v496 = vpop.permute.xlu0 %495
    %v498 = vmul.f32 %v496, %v169
    %v499 = vadd.f32 %v493, %v498
    %v500 = vadd.f32 %v474, %v499
    %v501 = vtanh.pop %v500
    %v502 = vrot.slane %v136, 6
    %v504 = vrot.slane %v141, 5
    %v506 = vsel %vm213, %v502, %v504
    %508 = vset.pattern.permute.xlu0 0
    %509 = vperm.xlu0 %508, %v501
    %v510 = vpop.permute.xlu0 %509
    %v512 = vmul.f32 %v510, %v174
    %513 = vset.pattern.permute.xlu0 1
    %514 = vperm.xlu0 %513, %v501
    %v515 = vpop.permute.xlu0 %514
    %v517 = vmul.f32 %v515, %v178
    %v518 = vadd.f32 %v512, %v517
    %519 = vset.pattern.permute.xlu0 2
    %520 = vperm.xlu0 %519, %v501
    %v521 = vpop.permute.xlu0 %520
    %v523 = vmul.f32 %v521, %v182
    %v524 = vadd.f32 %v518, %v523
    %v525 = vadd.f32 %v524, %v201
    %v526 = vmul.f32 %v485, %v148
    %v527 = vmul.f32 %v490, %v152
    %v528 = vadd.f32 %v526, %v527
    %v529 = vmul.f32 %v496, %v156
    %v530 = vadd.f32 %v528, %v529
    %v531 = vadd.f32 %v506, %v530
    %v532 = vtanh.pop %v531
    %534 = vset.pattern.permute.xlu0 0
    %535 = vperm.xlu0 %534, %v532
    %v536 = vpop.permute.xlu0 %535
    %v538 = vmul.f32 %v536, %v161
    %539 = vset.pattern.permute.xlu0 1
    %540 = vperm.xlu0 %539, %v532
    %v541 = vpop.permute.xlu0 %540
    %v543 = vmul.f32 %v541, %v165
    %v544 = vadd.f32 %v538, %v543
    %545 = vset.pattern.permute.xlu0 2
    %546 = vperm.xlu0 %545, %v532
    %v547 = vpop.permute.xlu0 %546
    %v549 = vmul.f32 %v547, %v169
    %v550 = vadd.f32 %v544, %v549
    %v551 = vadd.f32 %v525, %v550
    %v552 = vtanh.pop %v551
    %v553 = vrot.slane %v136, 7
    %v555 = vrot.slane %v141, 6
    %v557 = vsel %vm213, %v553, %v555
    %559 = vset.pattern.permute.xlu0 0
    %560 = vperm.xlu0 %559, %v552
    %v561 = vpop.permute.xlu0 %560
    %v563 = vmul.f32 %v561, %v174
    %564 = vset.pattern.permute.xlu0 1
    %565 = vperm.xlu0 %564, %v552
    %v566 = vpop.permute.xlu0 %565
    %v568 = vmul.f32 %v566, %v178
    %v569 = vadd.f32 %v563, %v568
    %570 = vset.pattern.permute.xlu0 2
    %571 = vperm.xlu0 %570, %v552
    %v572 = vpop.permute.xlu0 %571
    %v574 = vmul.f32 %v572, %v182
    %v575 = vadd.f32 %v569, %v574
    %v576 = vadd.f32 %v575, %v201
    %v577 = vmul.f32 %v536, %v148
    %v578 = vmul.f32 %v541, %v152
    %v579 = vadd.f32 %v577, %v578
    %v580 = vmul.f32 %v547, %v156
    %v581 = vadd.f32 %v579, %v580
    %v582 = vadd.f32 %v557, %v581
    %v583 = vtanh.pop %v582
    %585 = vset.pattern.permute.xlu0 0
    %586 = vperm.xlu0 %585, %v583
    %v587 = vpop.permute.xlu0 %586
    %v589 = vmul.f32 %v587, %v161
    %590 = vset.pattern.permute.xlu0 1
    %591 = vperm.xlu0 %590, %v583
    %v592 = vpop.permute.xlu0 %591
    %v594 = vmul.f32 %v592, %v165
    %v595 = vadd.f32 %v589, %v594
    %596 = vset.pattern.permute.xlu0 2
    %597 = vperm.xlu0 %596, %v583
    %v598 = vpop.permute.xlu0 %597
    %v600 = vmul.f32 %v598, %v169
    %v601 = vadd.f32 %v595, %v600
    %v602 = vadd.f32 %v576, %v601
    %v603 = vtanh.pop %v602
    %605 = vset.pattern.permute.xlu0 0
    %606 = vperm.xlu0 %605, %v603
    %v607 = vpop.permute.xlu0 %606
    %v609 = vmul.f32 %v607, %v187
    %610 = vset.pattern.permute.xlu0 1
    %611 = vperm.xlu0 %610, %v603
    %v612 = vpop.permute.xlu0 %611
    %v614 = vmul.f32 %v612, %v191
    %v615 = vadd.f32 %v609, %v614
    %616 = vset.pattern.permute.xlu0 2
    %617 = vperm.xlu0 %616, %v603
    %v618 = vpop.permute.xlu0 %617
    %v620 = vmul.f32 %v618, %v195
    %v621 = vadd.f32 %v615, %v620
    %v622 = vadd.f32 %v621, %v208
    %vm623 = vcmask 41984
    %624 = vst.msk [vmem:[#allocation2] sm:$0x3] %vm623, %v622
    // Predicated region
    $region38: #{task_recog_forward.1} parent=1 // pred_check
      _
    $region39: #{task_recog_forward.1} parent=1 // pred_check_branch
      %626 = sbr.rel (0) target = $region41
    $region40: #{task_recog_forward.1} parent=1 // pred_region
      %s628 = ssub.s32 32, 32
      %629 = vsyncadd [#allocation3], %s628
      %s631 = sshll.u32 [#allocation2], 4
      %s632 = int_to_ptr.vmem [resolvable:$true] %s631
      %634 = dma.vmem_to_hbm [thread:$0]  %s632, 32, %s9, [#allocation3]
    $region41: #{task_recog_forward.1} parent=1 // pred_fallthru
      _
    // Predicated region
    $region42: #{task_recog_forward.1} parent=1 // pred_check
      _
    $region43: #{task_recog_forward.1} parent=1 // pred_check_branch
      %636 = sbr.rel (0) target = $region45
    $region44: #{task_recog_forward.1} parent=1 // pred_region
      %637 = dma.done [#allocation3], 32
    $region45: #{task_recog_forward.1} parent=1 // pred_fallthru
      _
    %638 = vsyncpa [#allocation3], 1

</llo_original>
